<compile_context>
chip_gen: v5e
topology: v5e:2x2
jax: 0.10.0
libtpu: 0.0.40
codegen_flags: <defaults>
</compile_context>

<pallas_src>
import math

import jax
import jax.numpy as jnp
from jax.experimental import pallas as pl
from jax.experimental.pallas import tpu as pltpu


def _round_up(v, m):
    return ((v + m - 1) // m) * m


# ---------------------------------------------------------------------------
# Kernels
# ---------------------------------------------------------------------------
def _noisy_linear_train_kernel(x_ref, wmu_ref, wsig_ref, ein_ref, eout_ref,
                               b_ref, o_ref, acc_ref):
    k = pl.program_id(2)

    @pl.when(k == 0)
    def _():
        acc_ref[...] = jnp.zeros_like(acc_ref)

    # Rank-1 factorised noise rebuilt per tile in f32: (tk,1) * (1,tn) -> (tk,tn).
    eps = ein_ref[...] * eout_ref[...]
    # Noisy weight built in f32, cast to bf16 only for the MXU push.
    w = (wmu_ref[...].astype(jnp.float32)
         + wsig_ref[...].astype(jnp.float32) * eps).astype(jnp.bfloat16)

    # Native (tm,tk) x (tk,tn) matmul — weights pre-transposed at prepare time,
    # bf16 inputs, f32 accumulation.
    acc_ref[...] += jnp.dot(x_ref[...], w, preferred_element_type=jnp.float32)

    @pl.when(k == pl.num_programs(2) - 1)
    def _():
        o_ref[...] = (acc_ref[...] + b_ref[...]).astype(o_ref.dtype)


def _linear_eval_kernel(x_ref, wmu_ref, b_ref, o_ref, acc_ref):
    k = pl.program_id(2)

    @pl.when(k == 0)
    def _():
        acc_ref[...] = jnp.zeros_like(acc_ref)

    acc_ref[...] += jnp.dot(x_ref[...], wmu_ref[...],
                            preferred_element_type=jnp.float32)

    @pl.when(k == pl.num_programs(2) - 1)
    def _():
        o_ref[...] = (acc_ref[...] + b_ref[...]).astype(o_ref.dtype)


# ---------------------------------------------------------------------------
# Planning / one-time parameter preparation (padding + bf16 cast + transpose
# happen ONCE here, not per forward call).
# ---------------------------------------------------------------------------
def plan_noisy_linear(batch, in_features, out_features, *,
                      tm=512, tn=512, tk=1024):
    tm = min(tm, _round_up(batch, 8))
    tn = min(tn, _round_up(out_features, 128))
    tk = min(tk, _round_up(in_features, 128))
    M = _round_up(batch, tm)
    N = _round_up(out_features, tn)
    K = _round_up(in_features, tk)
    # v7x megacore: keep >= 2 blocks across the two "parallel" grid axes so both
    # TensorCores get work (only while tn stays a multiple of 128).
    while (M // tm) * (N // tn) < 2 and tn % 256 == 0:
        tn //= 2
        N = _round_up(out_features, tn)
    return dict(batch=batch, in_features=in_features, out_features=out_features,
                tm=tm, tn=tn, tk=tk, M=M, N=N, K=K)


def prepare_noisy_linear(params, plan):
    """Pad/transpose/cast parameters once (per parameter or noise update)."""
    N, K = plan["N"], plan["K"]
    in_f, out_f = plan["in_features"], plan["out_features"]
    f32 = jnp.float32

    def pad2(a, r, c):
        return jnp.pad(a.astype(f32), ((0, r - a.shape[0]), (0, c - a.shape[1])))

    # Weights pre-transposed to (K, N) and stored bf16: native MXU matmul layout
    # and half the HBM bytes streamed per forward.
    wmu_t = pad2(params["weight_mu"].T, K, N).astype(jnp.bfloat16)
    wsig_t = pad2(params["weight_sigma"].T, K, N).astype(jnp.bfloat16)
    ein = pad2(params["eps_in"].reshape(in_f, 1), K, 1)        # (K, 1) f32
    eout = pad2(params["eps_out"].reshape(1, out_f), 1, N)     # (1, N) f32
    # Bias fused outside the kernel (O(N)): a single (1, N) stream per mode.
    b_train = pad2((params["bias_mu"]
                    + params["bias_sigma"] * params["bias_epsilon"]
                    ).reshape(1, out_f), 1, N)
    b_eval = pad2(params["bias_mu"].reshape(1, out_f), 1, N)
    return dict(wmu_t=wmu_t, wsig_t=wsig_t, ein=ein, eout=eout,
                b_train=b_train, b_eval=b_eval)


# ---------------------------------------------------------------------------
# Forward
# ---------------------------------------------------------------------------
def noisy_linear(x, prep, plan, *, is_training=True):
    batch, in_f = x.shape
    assert batch == plan["batch"] and in_f == plan["in_features"]
    tm, tn, tk = plan["tm"], plan["tn"], plan["tk"]
    M, N, K = plan["M"], plan["N"], plan["K"]

    # Activations streamed as bf16 (native MXU rate); accumulation stays f32.
    x_p = jnp.pad(x.astype(jnp.bfloat16), ((0, M - batch), (0, K - in_f)))

    grid = (M // tm, N // tn, K // tk)
    x_spec = pl.BlockSpec((tm, tk), lambda i, j, k: (i, k))
    w_spec = pl.BlockSpec((tk, tn), lambda i, j, k: (k, j))
    ein_spec = pl.BlockSpec((tk, 1), lambda i, j, k: (k, 0))
    eout_spec = pl.BlockSpec((1, tn), lambda i, j, k: (0, j))
    b_spec = pl.BlockSpec((1, tn), lambda i, j, k: (0, j))
    o_spec = pl.BlockSpec((tm, tn), lambda i, j, k: (i, j))

    # VMEM budget from the chosen tiles: double-buffered x/wmu/wsig/eps/bias/out
    # plus the f32 accumulator; 2x headroom, clamped <= 48 MiB (safe on v7x).
    vmem_bytes = (2 * (tm * tk * 2 + 2 * tk * tn * 2 + tk * 4 + 2 * tn * 4
                       + tm * tn * 4) + tm * tn * 4)
    vmem_limit = int(min(48 * 1024 * 1024, max(16 * 1024 * 1024, 2 * vmem_bytes)))

    cparams = pltpu.CompilerParams(
        dimension_semantics=("parallel", "parallel", "arbitrary"),
        vmem_limit_bytes=vmem_limit)

    out_shape = jax.ShapeDtypeStruct((M, N), jnp.float32)
    scratch = [pltpu.VMEM((tm, tn), jnp.float32)]

    if is_training:
        y = pl.pallas_call(
            _noisy_linear_train_kernel,
            out_shape=out_shape,
            grid_spec=pltpu.PrefetchScalarGridSpec(
                num_scalar_prefetch=0, grid=grid,
                in_specs=[x_spec, w_spec, w_spec, ein_spec, eout_spec, b_spec],
                out_specs=o_spec,
                scratch_shapes=scratch),
            compiler_params=cparams,
        )(x_p, prep["wmu_t"], prep["wsig_t"], prep["ein"], prep["eout"],
          prep["b_train"])
    else:
        # Eval mode: only weight_mu + bias_mu are streamed.
        y = pl.pallas_call(
            _linear_eval_kernel,
            out_shape=out_shape,
            grid_spec=pltpu.PrefetchScalarGridSpec(
                num_scalar_prefetch=0, grid=grid,
                in_specs=[x_spec, w_spec, b_spec],
                out_specs=o_spec,
                scratch_shapes=scratch),
            compiler_params=cparams,
        )(x_p, prep["wmu_t"], prep["b_eval"])

    return y[:batch, :plan["out_features"]]


# ---------------------------------------------------------------------------
# Deterministic parameter / noise construction (mirrors reset_parameters and
# reset_noise from the PyTorch module; weight_epsilon is kept factorised).
# ---------------------------------------------------------------------------
def _scale_noise(key, size):
    v = jax.random.normal(key, (size,), dtype=jnp.float32)
    return jnp.sign(v) * jnp.sqrt(jnp.abs(v))


def init_noisy_linear(key, in_features, out_features, std_init=0.4):
    k_wmu, k_bmu, k_ein, k_eout, k_beps = jax.random.split(key, 5)
    mu_range = 1.0 / math.sqrt(in_features)

    weight_mu = jax.random.uniform(
        k_wmu, (out_features, in_features), jnp.float32, -mu_range, mu_range)
    weight_sigma = jnp.full((out_features, in_features),
                            std_init / math.sqrt(in_features), jnp.float32)
    bias_mu = jax.random.uniform(
        k_bmu, (out_features,), jnp.float32, -mu_range, mu_range)
    bias_sigma = jnp.full((out_features,),
                          std_init / math.sqrt(out_features), jnp.float32)

    eps_in = _scale_noise(k_ein, in_features)   # factors of epsilon_out.ger(epsilon_in)
    eps_out = _scale_noise(k_eout, out_features)
    bias_epsilon = _scale_noise(k_beps, out_features)

    return dict(weight_mu=weight_mu, weight_sigma=weight_sigma,
                eps_out=eps_out, eps_in=eps_in,
                bias_mu=bias_mu, bias_sigma=bias_sigma,
                bias_epsilon=bias_epsilon)


if __name__ == "__main__":
    key = jax.random.PRNGKey(0)
    k_params, k_x = jax.random.split(key)

    batch, in_features, out_features = 8, 32, 64
    params = init_noisy_linear(k_params, in_features, out_features)
    x = jax.random.normal(k_x, (batch, in_features), dtype=jnp.float32)

    plan = plan_noisy_linear(batch, in_features, out_features)
    prep = prepare_noisy_linear(params, plan)   # one-time pad/transpose/bf16 cast

    f32 = jnp.float32
    hp = jax.lax.Precision.HIGHEST
    x_bf = x.astype(jnp.bfloat16).astype(f32)

    # --- training mode ---
    y = noisy_linear(x, prep, plan, is_training=True)
    jax.block_until_ready(y)

    # Reference with the same bf16 rounding as the kernel (tight tolerance).
    wmu_bf = params["weight_mu"].astype(jnp.bfloat16).astype(f32)
    wsig_bf = params["weight_sigma"].astype(jnp.bfloat16).astype(f32)
    eps_w = jnp.outer(params["eps_out"], params["eps_in"])
    w_bf = (wmu_bf + wsig_bf * eps_w).astype(jnp.bfloat16).astype(f32)
    b_train = params["bias_mu"] + params["bias_sigma"] * params["bias_epsilon"]
    y_ref_bf = jnp.dot(x_bf, w_bf.T, precision=hp) + b_train
    assert jnp.allclose(y, y_ref_bf, atol=1e-3, rtol=1e-3), "train-mode mismatch (bf16 ref)"

    # Loose sanity check vs. the pure-f32 PyTorch-equivalent reference.
    w_f32 = params["weight_mu"] + params["weight_sigma"] * eps_w
    y_ref_f32 = jnp.dot(x, w_f32.T, precision=hp) + b_train
    assert jnp.allclose(y, y_ref_f32, atol=5e-2, rtol=5e-2), "train-mode far from f32 ref"

    # --- eval mode ---
    y_eval = noisy_linear(x, prep, plan, is_training=False)
    jax.block_until_ready(y_eval)
    y_eval_ref = jnp.dot(x_bf, wmu_bf.T, precision=hp) + params["bias_mu"]
    assert jnp.allclose(y_eval, y_eval_ref, atol=1e-3, rtol=1e-3), "eval-mode mismatch (bf16 ref)"

    print("KERNEL_OK")
</pallas_src>

<mosaic_0001>
module attributes {stable_mosaic.version = 11 : i64} {
  func.func @_noisy_linear_train_kernel(%arg0: i32, %arg1: i32, %arg2: i32, %arg3: memref<8x128xbf16, #tpu.memory_space<vmem>>, %arg4: memref<128x128xbf16, #tpu.memory_space<vmem>>, %arg5: memref<128x128xbf16, #tpu.memory_space<vmem>>, %arg6: memref<128x1xf32, #tpu.memory_space<vmem>>, %arg7: memref<1x128xf32, #tpu.memory_space<vmem>>, %arg8: memref<1x128xf32, #tpu.memory_space<vmem>>, %arg9: memref<8x128xf32, #tpu.memory_space<vmem>>, %arg10: memref<8x128xf32, #tpu.memory_space<vmem>>) attributes {dimension_semantics = [#tpu.dimension_semantics<parallel>, #tpu.dimension_semantics<parallel>, #tpu.dimension_semantics<arbitrary>], iteration_bounds = array<i64: 1, 1, 1>, scalar_prefetch = 0 : i64, scratch_operands = 1 : i64, tpu.core_type = #tpu.core_type<tc>, window_params = [{transform_indices = @transform_0, window_bounds = array<i64: 8, 128>}, {transform_indices = @transform_1, window_bounds = array<i64: 128, 128>}, {transform_indices = @transform_2, window_bounds = array<i64: 128, 128>}, {transform_indices = @transform_3, window_bounds = array<i64: 128, 1>}, {transform_indices = @transform_4, window_bounds = array<i64: 1, 128>}, {transform_indices = @transform_5, window_bounds = array<i64: 1, 128>}, {transform_indices = @transform_6, window_bounds = array<i64: 8, 128>}]} {
    %c0_i32 = arith.constant 0 : i32
    %0 = arith.cmpi eq, %arg2, %c0_i32 : i32
    %1 = arith.extui %0 : i1 to i32
    %c0_i32_0 = arith.constant 0 : i32
    %2 = arith.cmpi ne, %1, %c0_i32_0 : i32
    scf.if %2 {
      %cst_16 = arith.constant 0.000000e+00 : f32
      %23 = vector.broadcast %cst_16 : f32 to vector<8x128xf32>
      %c0_17 = arith.constant 0 : index
      %c0_18 = arith.constant 0 : index
      %24 = vector.load %arg10[%c0_17, %c0_18] : memref<8x128xf32, #tpu.memory_space<vmem>>, vector<8x128xf32>
      tpu.vector_store %arg10[%c0_17, %c0_18], %23 {strides = array<i32>} : memref<8x128xf32, #tpu.memory_space<vmem>>, vector<8x128xf32>,
    } else {
    }
    %c0 = arith.constant 0 : index
    %c0_1 = arith.constant 0 : index
    %3 = vector.load %arg6[%c0, %c0_1] : memref<128x1xf32, #tpu.memory_space<vmem>>, vector<128x1xf32>
    %c0_2 = arith.constant 0 : index
    %c0_3 = arith.constant 0 : index
    %4 = vector.load %arg7[%c0_2, %c0_3] : memref<1x128xf32, #tpu.memory_space<vmem>>, vector<1x128xf32>
    %5 = vector.broadcast %3 : vector<128x1xf32> to vector<128x128xf32>
    %6 = vector.broadcast %4 : vector<1x128xf32> to vector<128x128xf32>
    %7 = arith.mulf %5, %6 : vector<128x128xf32>
    %c0_4 = arith.constant 0 : index
    %c0_5 = arith.constant 0 : index
    %8 = vector.load %arg4[%c0_4, %c0_5] : memref<128x128xbf16, #tpu.memory_space<vmem>>, vector<128x128xbf16>
    %9 = arith.extf %8 : vector<128x128xbf16> to vector<128x128xf32>
    %c0_6 = arith.constant 0 : index
    %c0_7 = arith.constant 0 : index
    %10 = vector.load %arg5[%c0_6, %c0_7] : memref<128x128xbf16, #tpu.memory_space<vmem>>, vector<128x128xbf16>
    %11 = arith.extf %10 : vector<128x128xbf16> to vector<128x128xf32>
    %12 = arith.mulf %11, %7 : vector<128x128xf32>
    %13 = arith.addf %9, %12 : vector<128x128xf32>
    %14 = arith.truncf %13 : vector<128x128xf32> to vector<128x128xbf16>
    %c0_8 = arith.constant 0 : index
    %c0_9 = arith.constant 0 : index
    %15 = vector.load %arg10[%c0_8, %c0_9] : memref<8x128xf32, #tpu.memory_space<vmem>>, vector<8x128xf32>
    %c0_10 = arith.constant 0 : index
    %c0_11 = arith.constant 0 : index
    %16 = vector.load %arg3[%c0_10, %c0_11] : memref<8x128xbf16, #tpu.memory_space<vmem>>, vector<8x128xbf16>
    %cst = arith.constant dense<0.000000e+00> : vector<8x128xf32>
    %17 = tpu.matmul %16, %14, %cst {dimension_numbers = #tpu.dot_dimension_numbers<[1], [0], [0], [1], [0, 0, 1, 1], [], []>} : vector<8x128xbf16>, vector<128x128xbf16>, vector<8x128xf32> -> vector<8x128xf32>
    %18 = arith.addf %15, %17 : vector<8x128xf32>
    %c0_12 = arith.constant 0 : index
    %c0_13 = arith.constant 0 : index
    %19 = vector.load %arg10[%c0_12, %c0_13] : memref<8x128xf32, #tpu.memory_space<vmem>>, vector<8x128xf32>
    tpu.vector_store %arg10[%c0_12, %c0_13], %18 {strides = array<i32>} : memref<8x128xf32, #tpu.memory_space<vmem>>, vector<8x128xf32>,
    %c0_i32_14 = arith.constant 0 : i32
    %20 = arith.cmpi eq, %arg2, %c0_i32_14 : i32
    %21 = arith.extui %20 : i1 to i32
    %c0_i32_15 = arith.constant 0 : i32
    %22 = arith.cmpi ne, %21, %c0_i32_15 : i32
    scf.if %22 {
      %c0_16 = arith.constant 0 : index
      %c0_17 = arith.constant 0 : index
      %23 = vector.load %arg10[%c0_16, %c0_17] : memref<8x128xf32, #tpu.memory_space<vmem>>, vector<8x128xf32>
      %c0_18 = arith.constant 0 : index
      %c0_19 = arith.constant 0 : index
      %24 = vector.load %arg8[%c0_18, %c0_19] : memref<1x128xf32, #tpu.memory_space<vmem>>, vector<1x128xf32>
      %25 = vector.broadcast %24 : vector<1x128xf32> to vector<8x128xf32>
      %26 = arith.addf %23, %25 : vector<8x128xf32>
      %c0_20 = arith.constant 0 : index
      %c0_21 = arith.constant 0 : index
      %27 = vector.load %arg9[%c0_20, %c0_21] : memref<8x128xf32, #tpu.memory_space<vmem>>, vector<8x128xf32>
      tpu.vector_store %arg9[%c0_20, %c0_21], %26 {strides = array<i32>} : memref<8x128xf32, #tpu.memory_space<vmem>>, vector<8x128xf32>,
    } else {
    }
    return
  }
  func.func @transform_0(%arg0: i32, %arg1: i32, %arg2: i32) -> (i32, i32) {
    %c0_i32 = arith.constant 0 : i32
    return %arg0, %arg2 : i32, i32
  }
  func.func @transform_1(%arg0: i32, %arg1: i32, %arg2: i32) -> (i32, i32) {
    %c0_i32 = arith.constant 0 : i32
    return %arg2, %arg1 : i32, i32
  }
  func.func @transform_2(%arg0: i32, %arg1: i32, %arg2: i32) -> (i32, i32) {
    %c0_i32 = arith.constant 0 : i32
    return %arg2, %arg1 : i32, i32
  }
  func.func @transform_3(%arg0: i32, %arg1: i32, %arg2: i32) -> (i32, i32) {
    %c0_i32 = arith.constant 0 : i32
    %c0_i32_0 = arith.constant 0 : i32
    return %arg2, %c0_i32 : i32, i32
  }
  func.func @transform_4(%arg0: i32, %arg1: i32, %arg2: i32) -> (i32, i32) {
    %c0_i32 = arith.constant 0 : i32
    %c0_i32_0 = arith.constant 0 : i32
    return %c0_i32, %arg1 : i32, i32
  }
  func.func @transform_5(%arg0: i32, %arg1: i32, %arg2: i32) -> (i32, i32) {
    %c0_i32 = arith.constant 0 : i32
    %c0_i32_0 = arith.constant 0 : i32
    return %c0_i32, %arg1 : i32, i32
  }
  func.func @transform_6(%arg0: i32, %arg1: i32, %arg2: i32) -> (i32, i32) {
    %c0_i32 = arith.constant 0 : i32
    return %arg0, %arg1 : i32, i32
  }
}

</mosaic_0001>

<llo_original>
// kernel: tpu_custom_call.1
$region0: #{tpu_custom_call.1}
  #allocation0 [shape = 'u32[]', space=smem, size = 0x4, offset = 0x4, fixed_abs, tag = 'smem constant byte address 0x4 - core index']
  #allocation1 [shape = 'u32[72,128]{1,0:T(1,128)}', space=vmem, size = 0x9000, scoped, tag = 'internal scratch']
  #allocation2 [shape = 'f32[8,128]{1,0:T(8,128)}', space=vmem, size = 0x1000, scoped, tag = 'scratch operand']
  %s0 = inlined_call_operand.hbm [shape: bf16[8,128], index: 0, kind: input, shape index: {}]
  %s1 = inlined_call_operand.vmem [shape: bf16[128,128], index: 1, kind: input, shape index: {}]
  %s2 = inlined_call_operand.vmem [shape: bf16[128,128], index: 2, kind: input, shape index: {}]
  %s3 = inlined_call_operand.vmem [shape: f32[128,1], index: 3, kind: input, shape index: {}]
  %s4 = inlined_call_operand.vmem [shape: f32[1,128], index: 4, kind: input, shape index: {}]
  %s5 = inlined_call_operand.vmem [shape: f32[1,128], index: 5, kind: input, shape index: {}]
  %s6 = inlined_call_operand.hbm [shape: f32[8,128], index: 6, kind: output, shape index: {}]
  %s7 = sld [smem:[#allocation0]]
  $region46: #{tpu_custom_call.1} parent=0
    _
  %s9 = ssub.s32 1, %s7
  %s10 = scalar_select 0, %s9, %s7
  $region1: #{tpu_custom_call.1} parent=0
    #allocation3 [shape = 'u8[2048]{0}', space=vmem, size = 0x800, scoped, tag = 'input window, operand 0, single buffered']
    #allocation4 [shape = 's32[1]{0}', space=sflag, size = 0x4, scoped, tag = 'scoped memory for tpu_custom_call.1']
    #allocation5 [shape = 's32[1]{0}', space=sflag, size = 0x4, scoped, tag = 'scoped memory for tpu_custom_call.1']
    #allocation6 [shape = 'u8[4096]{0}', space=vmem, size = 0x1000, scoped, tag = 'output window, operand 0, single buffered']
    %11 = vsyncpa [#allocation4], 0
    %12 = vsyncpa [#allocation5], 0
    // Predicated region
    $region2: #{tpu_custom_call.1} parent=1 // pred_check
      _
    $region3: #{tpu_custom_call.1} parent=1 // pred_check_branch
      %14 = sbr.rel (0) target = $region5
    $region4: #{tpu_custom_call.1} parent=1 // pred_region
      %16 = vsyncadd [#allocation4], 0
      %s18 = sshll.u32 %s0, 4
      %s19 = int_to_ptr.hbm [resolvable:$true] %s18
      %s20 = sshll.u32 [#allocation3], 4
      %s21 = int_to_ptr.vmem [resolvable:$true] %s20
      %23 = dma.hbm_to_vmem [thread:$0]  %s19, 64, %s21, [#allocation4]
    $region5: #{tpu_custom_call.1} parent=1 // pred_fallthru
      _
    // Predicated region
    $region6: #{tpu_custom_call.1} parent=1 // pred_check
      _
    $region7: #{tpu_custom_call.1} parent=1 // pred_check_branch
      %25 = sbr.rel (0) target = $region9
    $region8: #{tpu_custom_call.1} parent=1 // pred_region
      _
    $region9: #{tpu_custom_call.1} parent=1 // pred_fallthru
      _
    // Predicated region
    $region10: #{tpu_custom_call.1} parent=1 // pred_check
      _
    $region11: #{tpu_custom_call.1} parent=1 // pred_check_branch
      %27 = sbr.rel (0) target = $region13
    $region12: #{tpu_custom_call.1} parent=1 // pred_region
      _
    $region13: #{tpu_custom_call.1} parent=1 // pred_fallthru
      _
    // Predicated region
    $region14: #{tpu_custom_call.1} parent=1 // pred_check
      _
    $region15: #{tpu_custom_call.1} parent=1 // pred_check_branch
      %29 = sbr.rel (0) target = $region17
    $region16: #{tpu_custom_call.1} parent=1 // pred_region
      _
    $region17: #{tpu_custom_call.1} parent=1 // pred_fallthru
      _
    // Predicated region
    $region18: #{tpu_custom_call.1} parent=1 // pred_check
      _
    $region19: #{tpu_custom_call.1} parent=1 // pred_check_branch
      %31 = sbr.rel (0) target = $region21
    $region20: #{tpu_custom_call.1} parent=1 // pred_region
      _
    $region21: #{tpu_custom_call.1} parent=1 // pred_fallthru
      _
    // Predicated region
    $region22: #{tpu_custom_call.1} parent=1 // pred_check
      _
    $region23: #{tpu_custom_call.1} parent=1 // pred_check_branch
      %33 = sbr.rel (0) target = $region25
    $region24: #{tpu_custom_call.1} parent=1 // pred_region
      _
    $region25: #{tpu_custom_call.1} parent=1 // pred_fallthru
      _
    // Predicated region
    $region26: #{tpu_custom_call.1} parent=1 // pred_check
      _
    $region27: #{tpu_custom_call.1} parent=1 // pred_check_branch
      %35 = sbr.rel (0) target = $region29
    $region28: #{tpu_custom_call.1} parent=1 // pred_region
      %37 = dma.done [#allocation4], 64
    $region29: #{tpu_custom_call.1} parent=1 // pred_fallthru
      _
    %p38 = scmp.eq.s32.totalorder 0, 0
    // Predicated region
    $region30: #{tpu_custom_call.1} parent=1 // pred_check
      %p39 = pneg %p38
    $region31: #{tpu_custom_call.1} parent=1 // pred_check_branch
      %41 = sbr.rel (%p39) target = $region33
    $region32: #{tpu_custom_call.1} parent=1 // pred_region
      %42 = vst [vmem:[#allocation2] sm:$0xff] 0.0
    $region33: #{tpu_custom_call.1} parent=1 // pred_fallthru
      _
    %v43 = vld [vmem:[%s3] sm:$0xff]
    %v44 = vld [vmem:[%s3 + $0x8] sm:$0xff]
    %v45 = vld [vmem:[%s3 + $0x10] sm:$0xff]
    %v46 = vld [vmem:[%s3 + $0x18] sm:$0xff]
    %v47 = vld [vmem:[%s3 + $0x20] sm:$0xff]
    %v48 = vld [vmem:[%s3 + $0x28] sm:$0xff]
    %v49 = vld [vmem:[%s3 + $0x30] sm:$0xff]
    %v50 = vld [vmem:[%s3 + $0x38] sm:$0xff]
    %v51 = vld [vmem:[%s3 + $0x40] sm:$0xff]
    %v52 = vld [vmem:[%s3 + $0x48] sm:$0xff]
    %v53 = vld [vmem:[%s3 + $0x50] sm:$0xff]
    %v54 = vld [vmem:[%s3 + $0x58] sm:$0xff]
    %v55 = vld [vmem:[%s3 + $0x60] sm:$0xff]
    %v56 = vld [vmem:[%s3 + $0x68] sm:$0xff]
    %v57 = vld [vmem:[%s3 + $0x70] sm:$0xff]
    %v58 = vld [vmem:[%s3 + $0x78] sm:$0xff]
    %v59 = vld [vmem:[%s4] sm:$0x1]
    %61 = vset.pattern.permute.xlu0 0
    %62 = vperm.xlu0 %61, %v43
    %v63 = vpop.permute.xlu0 %62
    %66 = vset.pattern.permute.xlu0 0
    %67 = vperm.xlu0 %66, %v44
    %v68 = vpop.permute.xlu0 %67
    %71 = vset.pattern.permute.xlu0 0
    %72 = vperm.xlu0 %71, %v45
    %v73 = vpop.permute.xlu0 %72
    %76 = vset.pattern.permute.xlu0 0
    %77 = vperm.xlu0 %76, %v46
    %v78 = vpop.permute.xlu0 %77
    %81 = vset.pattern.permute.xlu0 0
    %82 = vperm.xlu0 %81, %v47
    %v83 = vpop.permute.xlu0 %82
    %86 = vset.pattern.permute.xlu0 0
    %87 = vperm.xlu0 %86, %v48
    %v88 = vpop.permute.xlu0 %87
    %91 = vset.pattern.permute.xlu0 0
    %92 = vperm.xlu0 %91, %v49
    %v93 = vpop.permute.xlu0 %92
    %96 = vset.pattern.permute.xlu0 0
    %97 = vperm.xlu0 %96, %v50
    %v98 = vpop.permute.xlu0 %97
    %101 = vset.pattern.permute.xlu0 0
    %102 = vperm.xlu0 %101, %v51
    %v103 = vpop.permute.xlu0 %102
    %106 = vset.pattern.permute.xlu0 0
    %107 = vperm.xlu0 %106, %v52
    %v108 = vpop.permute.xlu0 %107
    %111 = vset.pattern.permute.xlu0 0
    %112 = vperm.xlu0 %111, %v53
    %v113 = vpop.permute.xlu0 %112
    %116 = vset.pattern.permute.xlu0 0
    %117 = vperm.xlu0 %116, %v54
    %v118 = vpop.permute.xlu0 %117
    %121 = vset.pattern.permute.xlu0 0
    %122 = vperm.xlu0 %121, %v55
    %v123 = vpop.permute.xlu0 %122
    %126 = vset.pattern.permute.xlu0 0
    %127 = vperm.xlu0 %126, %v56
    %v128 = vpop.permute.xlu0 %127
    %131 = vset.pattern.permute.xlu0 0
    %132 = vperm.xlu0 %131, %v57
    %v133 = vpop.permute.xlu0 %132
    %136 = vset.pattern.permute.xlu0 0
    %137 = vperm.xlu0 %136, %v58
    %v138 = vpop.permute.xlu0 %137
    %v141 = vperm.slane %v59, 0
    %v143 = vmul.f32 %v63, %v141
    %v144 = vmul.f32 %v68, %v141
    %v145 = vmul.f32 %v73, %v141
    %v146 = vmul.f32 %v78, %v141
    %v147 = vmul.f32 %v83, %v141
    %v148 = vmul.f32 %v88, %v141
    %v149 = vmul.f32 %v93, %v141
    %v150 = vmul.f32 %v98, %v141
    %v151 = vmul.f32 %v103, %v141
    %v152 = vmul.f32 %v108, %v141
    %v153 = vmul.f32 %v113, %v141
    %v154 = vmul.f32 %v118, %v141
    %v155 = vmul.f32 %v123, %v141
    %v156 = vmul.f32 %v128, %v141
    %v157 = vmul.f32 %v133, %v141
    %v158 = vmul.f32 %v138, %v141
    %v159 = vld [vmem:[%s1] sm:$0xf]
    %v160 = vld [vmem:[%s1 + $0x4] sm:$0xf]
    %v161 = vld [vmem:[%s1 + $0x8] sm:$0xf]
    %v162 = vld [vmem:[%s1 + $0xc] sm:$0xf]
    %v163 = vld [vmem:[%s1 + $0x10] sm:$0xf]
    %v164 = vld [vmem:[%s1 + $0x14] sm:$0xf]
    %v165 = vld [vmem:[%s1 + $0x18] sm:$0xf]
    %v166 = vld [vmem:[%s1 + $0x1c] sm:$0xf]
    %v167 = vld [vmem:[%s1 + $0x20] sm:$0xf]
    %v168 = vld [vmem:[%s1 + $0x24] sm:$0xf]
    %v169 = vld [vmem:[%s1 + $0x28] sm:$0xf]
    %v170 = vld [vmem:[%s1 + $0x2c] sm:$0xf]
    %v171 = vld [vmem:[%s1 + $0x30] sm:$0xf]
    %v172 = vld [vmem:[%s1 + $0x34] sm:$0xf]
    %v173 = vld [vmem:[%s1 + $0x38] sm:$0xf]
    %v174 = vld [vmem:[%s1 + $0x3c] sm:$0xf]
    %v175 = vunpack.c.l.bf16 %v159
    %v176 = vunpack.c.l.bf16 %v160
    %v177 = vunpack.c.l.bf16 %v161
    %v178 = vunpack.c.l.bf16 %v162
    %v179 = vunpack.c.l.bf16 %v163
    %v180 = vunpack.c.l.bf16 %v164
    %v181 = vunpack.c.l.bf16 %v165
    %v182 = vunpack.c.l.bf16 %v166
    %v183 = vunpack.c.l.bf16 %v167
    %v184 = vunpack.c.l.bf16 %v168
    %v185 = vunpack.c.l.bf16 %v169
    %v186 = vunpack.c.l.bf16 %v170
    %v187 = vunpack.c.l.bf16 %v171
    %v188 = vunpack.c.l.bf16 %v172
    %v189 = vunpack.c.l.bf16 %v173
    %v190 = vunpack.c.l.bf16 %v174
    %v191 = vld [vmem:[%s2] sm:$0xf]
    %v192 = vld [vmem:[%s2 + $0x4] sm:$0xf]
    %v193 = vld [vmem:[%s2 + $0x8] sm:$0xf]
    %v194 = vld [vmem:[%s2 + $0xc] sm:$0xf]
    %v195 = vld [vmem:[%s2 + $0x10] sm:$0xf]
    %v196 = vld [vmem:[%s2 + $0x14] sm:$0xf]
    %v197 = vld [vmem:[%s2 + $0x18] sm:$0xf]
    %v198 = vld [vmem:[%s2 + $0x1c] sm:$0xf]
    %v199 = vld [vmem:[%s2 + $0x20] sm:$0xf]
    %v200 = vld [vmem:[%s2 + $0x24] sm:$0xf]
    %v201 = vld [vmem:[%s2 + $0x28] sm:$0xf]
    %v202 = vld [vmem:[%s2 + $0x2c] sm:$0xf]
    %v203 = vld [vmem:[%s2 + $0x30] sm:$0xf]
    %v204 = vld [vmem:[%s2 + $0x34] sm:$0xf]
    %v205 = vld [vmem:[%s2 + $0x38] sm:$0xf]
    %v206 = vld [vmem:[%s2 + $0x3c] sm:$0xf]
    %v207 = vunpack.c.l.bf16 %v191
    %v208 = vunpack.c.l.bf16 %v192
    %v209 = vunpack.c.l.bf16 %v193
    %v210 = vunpack.c.l.bf16 %v194
    %v211 = vunpack.c.l.bf16 %v195
    %v212 = vunpack.c.l.bf16 %v196
    %v213 = vunpack.c.l.bf16 %v197
    %v214 = vunpack.c.l.bf16 %v198
    %v215 = vunpack.c.l.bf16 %v199
    %v216 = vunpack.c.l.bf16 %v200
    %v217 = vunpack.c.l.bf16 %v201
    %v218 = vunpack.c.l.bf16 %v202
    %v219 = vunpack.c.l.bf16 %v203
    %v220 = vunpack.c.l.bf16 %v204
    %v221 = vunpack.c.l.bf16 %v205
    %v222 = vunpack.c.l.bf16 %v206
    %v223 = vmul.f32 %v207, %v143
    %v224 = vmul.f32 %v208, %v144
    %v225 = vmul.f32 %v209, %v145
    %v226 = vmul.f32 %v210, %v146
    %v227 = vmul.f32 %v211, %v147
    %v228 = vmul.f32 %v212, %v148
    %v229 = vmul.f32 %v213, %v149
    %v230 = vmul.f32 %v214, %v150
    %v231 = vmul.f32 %v215, %v151
    %v232 = vmul.f32 %v216, %v152
    %v233 = vmul.f32 %v217, %v153
    %v234 = vmul.f32 %v218, %v154
    %v235 = vmul.f32 %v219, %v155
    %v236 = vmul.f32 %v220, %v156
    %v237 = vmul.f32 %v221, %v157
    %v238 = vmul.f32 %v222, %v158
    %v239 = vadd.f32 %v175, %v223
    %v240 = vadd.f32 %v176, %v224
    %v241 = vadd.f32 %v177, %v225
    %v242 = vadd.f32 %v178, %v226
    %v243 = vadd.f32 %v179, %v227
    %v244 = vadd.f32 %v180, %v228
    %v245 = vadd.f32 %v181, %v229
    %v246 = vadd.f32 %v182, %v230
    %v247 = vadd.f32 %v183, %v231
    %v248 = vadd.f32 %v184, %v232
    %v249 = vadd.f32 %v185, %v233
    %v250 = vadd.f32 %v186, %v234
    %v251 = vadd.f32 %v187, %v235
    %v252 = vadd.f32 %v188, %v236
    %v253 = vadd.f32 %v189, %v237
    %v254 = vadd.f32 %v190, %v238
    %v255 = vpack.c.bf16 %v240, %v239
    %v256 = vpack.c.bf16 %v242, %v241
    %v257 = vpack.c.bf16 %v244, %v243
    %v258 = vpack.c.bf16 %v246, %v245
    %v259 = vpack.c.bf16 %v248, %v247
    %v260 = vpack.c.bf16 %v250, %v249
    %v261 = vpack.c.bf16 %v252, %v251
    %v262 = vpack.c.bf16 %v254, %v253
    %v263 = vld [vmem:[#allocation2] sm:$0xff]
    %v264 = vld [vmem:[#allocation3] sm:$0xf]
    %265 = vmatpush.bf16.msra.mxu0 %v262
    %266 = vmatpush.bf16.msra.mxu0 %v261
    %267 = vmatpush.bf16.msra.mxu0 %v260
    %268 = vmatpush.bf16.msra.mxu0 %v259
    %269 = vmatpush.bf16.msra.mxu0 %v258
    %270 = vmatpush.bf16.msra.mxu0 %v257
    %271 = vmatpush.bf16.msra.mxu0 %v256
    %272 = vmatpush.bf16.msra.mxu0 %v255
    %273 = vmatmul.bf16.gmra.mxu0 %v264
    %v274 = vpop.f32.mrf.mxu0
    %v275 = vadd.f32 0.0, %v274
    %v276 = vpop.f32.mrf.mxu0
    %277 = vdwg.mxu0
    %v278 = vadd.f32 %v263, %v275
    %279 = vst [vmem:[#allocation2] sm:$0xff] %v278
    // Predicated region
    $region34: #{tpu_custom_call.1} parent=1 // pred_check
      %p280 = pneg %p38
    $region35: #{tpu_custom_call.1} parent=1 // pred_check_branch
      %282 = sbr.rel (%p280) target = $region37
    $region36: #{tpu_custom_call.1} parent=1 // pred_region
      %v283 = vld [vmem:[#allocation2] sm:$0xff]
      %v284 = vld [vmem:[%s5] sm:$0x1]
      %v286 = vperm.slane %v284, 0
      %v288 = vadd.f32 %v283, %v286
      %289 = vst [vmem:[#allocation6] sm:$0xff] %v288
    $region37: #{tpu_custom_call.1} parent=1 // pred_fallthru
      _
    // Predicated region
    $region38: #{tpu_custom_call.1} parent=1 // pred_check
      _
    $region39: #{tpu_custom_call.1} parent=1 // pred_check_branch
      %291 = sbr.rel (0) target = $region41
    $region40: #{tpu_custom_call.1} parent=1 // pred_region
      %293 = vsyncadd [#allocation5], 0
      %s295 = sshll.u32 [#allocation6], 4
      %s296 = int_to_ptr.vmem [resolvable:$true] %s295
      %s297 = sshll.u32 %s6, 4
      %s298 = int_to_ptr.hbm [resolvable:$true] %s297
      %300 = dma.vmem_to_hbm [thread:$0]  %s296, 128, %s298, [#allocation5]
    $region41: #{tpu_custom_call.1} parent=1 // pred_fallthru
      _
    // Predicated region
    $region42: #{tpu_custom_call.1} parent=1 // pred_check
      _
    $region43: #{tpu_custom_call.1} parent=1 // pred_check_branch
      %302 = sbr.rel (0) target = $region45
    $region44: #{tpu_custom_call.1} parent=1 // pred_region
      %304 = dma.done [#allocation5], 128
    $region45: #{tpu_custom_call.1} parent=1 // pred_fallthru
      _
    %305 = vsyncpa [#allocation4], 1
    %306 = vsyncpa [#allocation5], 1

</llo_original>
